<compile_context>
chip_gen: v7x
topology: tpu7x:2x2x1
jax: 0.10.0
libtpu: 0.0.40
codegen_flags: <defaults>
</compile_context>

<pallas_src>
import functools

import jax
import jax.numpy as jnp
from jax.experimental import pallas as pl
from jax.experimental.pallas import tpu as pltpu


# ---------------------------- Fused Pallas kernel ----------------------------

def gat_forward_kernel(x_ref, maskb_ref, pool_ref, *rest, layers):
    """Whole-model GAT forward, VMEM resident.

    x_ref    : (N, Fin)   input node features
    maskb_ref: (N, N)     additive mask, 0 where edge (incl. self-loop), -1e30 elsewhere
    pool_ref : (G, N)     global mean-pooling matrix (row g = 1/|graph g| on its nodes)
    rest     : per-layer (w, att_src, att_dst, bias) x n_layers, then fc_w, fc_b, o_ref
    layers   : static tuple of (heads, out_dim, concat) per GATConv layer
    """
    fc_w_ref, fc_b_ref, o_ref = rest[-3], rest[-2], rest[-1]
    layer_refs = rest[:-3]

    x = x_ref[...]                      # [N, Fin] — stays VMEM-resident across layers
    mask_bias = maskb_ref[...]          # [N, N]

    for li, (heads, out_dim, concat) in enumerate(layers):
        w_ref, asrc_ref, adst_ref, bias_ref = layer_refs[4 * li:4 * li + 4]

        # Projection, heads packed on lanes: [N, H*F].
        xw = jnp.dot(x, w_ref[...], preferred_element_type=jnp.float32)

        head_outs = []
        for h in range(heads):                               # H <= 2, statically unrolled
            xh = xw[:, h * out_dim:(h + 1) * out_dim]        # [N, F] static lane slice
            a_s = asrc_ref[h:h + 1, :]                       # [1, F]
            a_d = adst_ref[h:h + 1, :]                       # [1, F]
            # MXU contractions -> no cross-lane transposes.
            src_row = jax.lax.dot_general(a_s, xh, (((1,), (1,)), ((), ())),
                                          preferred_element_type=jnp.float32)   # [1, N]
            dst_col = jax.lax.dot_general(xh, a_d, (((1,), (1,)), ((), ())),
                                          preferred_element_type=jnp.float32)   # [N, 1]
            scores = dst_col + src_row                                           # [N_dst, N_src]
            scores = jnp.where(scores > 0.0, scores, 0.2 * scores)               # LeakyReLU(0.2)
            scores = scores + mask_bias                                          # additive mask
            m = jnp.max(scores, axis=-1, keepdims=True)
            p = jnp.exp(scores - m)                # masked entries -> exp(-huge) == 0
            denom = jnp.maximum(jnp.sum(p, axis=-1, keepdims=True), 1e-30)
            alpha = p * pl.reciprocal(denom, approx=True)    # EUP reciprocal, ~free slot
            head_outs.append(jnp.dot(alpha, xh, preferred_element_type=jnp.float32))

        if concat:
            y = head_outs[0] if heads == 1 else jnp.concatenate(head_outs, axis=-1)
        else:
            acc = head_outs[0]
            for t in head_outs[1:]:
                acc = acc + t
            y = acc * (1.0 / heads)

        y = y + bias_ref[...]
        # F.elu (alpha=1).
        x = jnp.where(y > 0.0, y, jnp.exp(y) - 1.0)

    # Global mean pooling ([G,N] @ [N,D]) + final Linear (+ bias), still in VMEM.
    pooled = jnp.dot(pool_ref[...], x, preferred_element_type=jnp.float32)
    o_ref[...] = jnp.dot(pooled, fc_w_ref[...], preferred_element_type=jnp.float32) + fc_b_ref[...]


# ---------------------------- Wrapper ----------------------------

def gat_forward(params, x, mask_bias, pool_mat):
    """Whole GAT forward as a single pallas_call."""
    g = pool_mat.shape[0]
    out = params["fc_w"].shape[1]
    layers = tuple((l["heads"], l["out_dim"], l["concat"]) for l in params["convs"])
    kernel = functools.partial(gat_forward_kernel, layers=layers)

    in_arrays = [x, mask_bias, pool_mat]
    for l in params["convs"]:
        in_arrays += [l["w"], l["att_src"], l["att_dst"], l["bias"]]
    in_arrays += [params["fc_w"], params["fc_b"]]

    in_specs = [pl.BlockSpec(a.shape, lambda i: (0, 0)) for a in in_arrays]

    return pl.pallas_call(
        kernel,
        out_shape=jax.ShapeDtypeStruct((g, out), jnp.float32),
        grid=(1,),
        in_specs=in_specs,
        out_specs=pl.BlockSpec((g, out), lambda i: (0, 0)),
        compiler_params=pltpu.CompilerParams(dimension_semantics=("arbitrary",)),
    )(*in_arrays)


# ---------------------------- Parameter init ----------------------------

def glorot(key, shape):
    fan_in, fan_out = shape[-2], shape[-1]
    limit = (6.0 / (fan_in + fan_out)) ** 0.5
    return jax.random.uniform(key, shape, jnp.float32, -limit, limit)


def init_params(key, in_channels, dimensions, heads, out_channels):
    convs = []
    for i, (dim, h) in enumerate(zip(dimensions, heads)):
        in_dim = in_channels if i == 0 else dimensions[i - 1]
        prev_heads = 1 if i == 0 else heads[i - 1]
        in_feats = in_dim * prev_heads
        concat = i != len(dimensions) - 1
        dout = h * dim if concat else dim
        key, k1, k2, k3 = jax.random.split(key, 4)
        convs.append(dict(
            w=glorot(k1, (in_feats, h * dim)),          # lin weight (bias=False in GATConv)
            att_src=glorot(k2, (h, dim)),
            att_dst=glorot(k3, (h, dim)),
            bias=jnp.zeros((1, dout), jnp.float32),
            heads=h, out_dim=dim, concat=concat))
    key, kf = jax.random.split(key)
    fc_w = glorot(kf, (dimensions[-1], out_channels))
    fc_b = jnp.zeros((1, out_channels), jnp.float32)
    return dict(convs=convs, fc_w=fc_w, fc_b=fc_b)


# ---------------------------- Example run ----------------------------

if __name__ == "__main__":
    # Config: in_channels=8, dimensions=[16, 8], heads=[2, 1] (last layer must have 1 head),
    # dropout_rates=[0, 0] (eval mode), out_channels=4,
    # global_pooling='mean', concat_global_pooling=None.
    in_channels, dimensions, heads, out_channels = 8, [16, 8], [2, 1], 4
    N_per_graph, G = 8, 2
    N = N_per_graph * G

    key = jax.random.PRNGKey(0)
    key, kx = jax.random.split(key)
    x = jax.random.normal(kx, (N, in_channels), jnp.float32)

    # Deterministic edge_index: bidirectional ring inside each graph (source row 0, target row 1).
    src, dst = [], []
    for g in range(G):
        base = g * N_per_graph
        for i in range(N_per_graph):
            j = (i + 1) % N_per_graph
            src += [base + i, base + j]
            dst += [base + j, base + i]
    edge_index = jnp.array([src, dst], dtype=jnp.int32)   # [2, E]
    # data.edge_attr exists in the Batch but is ignored by GATConv(edge_dim=None).

    # Dense adjacency adj[dst, src] with self-loops (GATConv add_self_loops=True),
    # converted once to an additive softmax mask: 0 where edge, -1e30 elsewhere.
    adj = jnp.zeros((N, N), jnp.float32).at[edge_index[1], edge_index[0]].set(1.0)
    adj = adj.at[jnp.arange(N), jnp.arange(N)].set(1.0)
    mask_bias = jnp.where(adj > 0.0, 0.0, -1e30).astype(jnp.float32)

    # Global mean pooling matrix built from data.batch (node -> graph assignment).
    batch = jnp.repeat(jnp.arange(G), N_per_graph)
    one_hot = (batch[None, :] == jnp.arange(G)[:, None]).astype(jnp.float32)
    pool_mat = one_hot / jnp.sum(one_hot, axis=1, keepdims=True)   # [G, N]

    params = init_params(key, in_channels, dimensions, heads, out_channels)

    out = jax.block_until_ready(gat_forward(params, x, mask_bias, pool_mat))
    assert out.shape == (G, out_channels), out.shape
    assert bool(jnp.all(jnp.isfinite(out)))
    print("KERNEL_OK")
</pallas_src>

<mosaic_0001>
module attributes {stable_mosaic.version = 11 : i64} {
  func.func @gat_forward_kernel(%arg0: i32, %arg1: memref<16x8xf32, #tpu.memory_space<vmem>>, %arg2: memref<16x16xf32, #tpu.memory_space<vmem>>, %arg3: memref<2x16xf32, #tpu.memory_space<vmem>>, %arg4: memref<8x32xf32, #tpu.memory_space<vmem>>, %arg5: memref<2x16xf32, #tpu.memory_space<vmem>>, %arg6: memref<2x16xf32, #tpu.memory_space<vmem>>, %arg7: memref<1x32xf32, #tpu.memory_space<vmem>>, %arg8: memref<32x8xf32, #tpu.memory_space<vmem>>, %arg9: memref<1x8xf32, #tpu.memory_space<vmem>>, %arg10: memref<1x8xf32, #tpu.memory_space<vmem>>, %arg11: memref<1x8xf32, #tpu.memory_space<vmem>>, %arg12: memref<8x4xf32, #tpu.memory_space<vmem>>, %arg13: memref<1x4xf32, #tpu.memory_space<vmem>>, %arg14: memref<2x4xf32, #tpu.memory_space<vmem>>) attributes {dimension_semantics = [#tpu.dimension_semantics<arbitrary>], iteration_bounds = array<i64: 1>, scalar_prefetch = 0 : i64, scratch_operands = 0 : i64, tpu.core_type = #tpu.core_type<tc>, window_params = [{pipeline_mode = #tpu.pipeline_mode<synchronous>, transform_indices = @transform_0, window_bounds = array<i64: 16, 8>}, {pipeline_mode = #tpu.pipeline_mode<synchronous>, transform_indices = @transform_1, window_bounds = array<i64: 16, 16>}, {pipeline_mode = #tpu.pipeline_mode<synchronous>, transform_indices = @transform_2, window_bounds = array<i64: 2, 16>}, {pipeline_mode = #tpu.pipeline_mode<synchronous>, transform_indices = @transform_3, window_bounds = array<i64: 8, 32>}, {pipeline_mode = #tpu.pipeline_mode<synchronous>, transform_indices = @transform_4, window_bounds = array<i64: 2, 16>}, {pipeline_mode = #tpu.pipeline_mode<synchronous>, transform_indices = @transform_5, window_bounds = array<i64: 2, 16>}, {pipeline_mode = #tpu.pipeline_mode<synchronous>, transform_indices = @transform_6, window_bounds = array<i64: 1, 32>}, {pipeline_mode = #tpu.pipeline_mode<synchronous>, transform_indices = @transform_7, window_bounds = array<i64: 32, 8>}, {pipeline_mode = #tpu.pipeline_mode<synchronous>, transform_indices = @transform_8, window_bounds = array<i64: 1, 8>}, {pipeline_mode = #tpu.pipeline_mode<synchronous>, transform_indices = @transform_9, window_bounds = array<i64: 1, 8>}, {pipeline_mode = #tpu.pipeline_mode<synchronous>, transform_indices = @transform_10, window_bounds = array<i64: 1, 8>}, {pipeline_mode = #tpu.pipeline_mode<synchronous>, transform_indices = @transform_11, window_bounds = array<i64: 8, 4>}, {pipeline_mode = #tpu.pipeline_mode<synchronous>, transform_indices = @transform_12, window_bounds = array<i64: 1, 4>}, {pipeline_mode = #tpu.pipeline_mode<synchronous>, transform_indices = @transform_13, window_bounds = array<i64: 2, 4>}]} {
    %c0 = arith.constant 0 : index
    %c0_0 = arith.constant 0 : index
    %0 = vector.load %arg1[%c0, %c0_0] : memref<16x8xf32, #tpu.memory_space<vmem>>, vector<16x8xf32>
    %c0_1 = arith.constant 0 : index
    %c0_2 = arith.constant 0 : index
    %1 = vector.load %arg2[%c0_1, %c0_2] : memref<16x16xf32, #tpu.memory_space<vmem>>, vector<16x16xf32>
    %c0_3 = arith.constant 0 : index
    %c0_4 = arith.constant 0 : index
    %2 = vector.load %arg4[%c0_3, %c0_4] : memref<8x32xf32, #tpu.memory_space<vmem>>, vector<8x32xf32>
    %cst = arith.constant dense<0.000000e+00> : vector<16x32xf32>
    %3 = tpu.matmul %0, %2, %cst {dimension_numbers = #tpu.dot_dimension_numbers<[1], [0], [0], [1], [0, 0, 1, 1], [], []>} : vector<16x8xf32>, vector<8x32xf32>, vector<16x32xf32> -> vector<16x32xf32>
    %4 = vector.extract_strided_slice %3 {offsets = [0, 0], sizes = [16, 16], strides = [1, 1]} : vector<16x32xf32> to vector<16x16xf32>
    %c0_5 = arith.constant 0 : index
    %c0_6 = arith.constant 0 : index
    %5 = vector.load %arg5[%c0_5, %c0_6] : memref<2x16xf32, #tpu.memory_space<vmem>>, vector<1x16xf32>
    %c0_7 = arith.constant 0 : index
    %c0_8 = arith.constant 0 : index
    %6 = vector.load %arg6[%c0_7, %c0_8] : memref<2x16xf32, #tpu.memory_space<vmem>>, vector<1x16xf32>
    %cst_9 = arith.constant dense<0.000000e+00> : vector<1x16xf32>
    %7 = tpu.matmul %5, %4, %cst_9 {dimension_numbers = #tpu.dot_dimension_numbers<[1], [1], [0], [0], [0, 0, 1, 0], [], []>} : vector<1x16xf32>, vector<16x16xf32>, vector<1x16xf32> -> vector<1x16xf32>
    %cst_10 = arith.constant dense<0.000000e+00> : vector<16x1xf32>
    %8 = tpu.matmul %4, %6, %cst_10 {dimension_numbers = #tpu.dot_dimension_numbers<[1], [1], [0], [0], [0, 0, 1, 0], [], []>} : vector<16x16xf32>, vector<1x16xf32>, vector<16x1xf32> -> vector<16x1xf32>
    %9 = vector.broadcast %8 : vector<16x1xf32> to vector<16x16xf32>
    %10 = vector.broadcast %7 : vector<1x16xf32> to vector<16x16xf32>
    %11 = arith.addf %9, %10 : vector<16x16xf32>
    %cst_11 = arith.constant 0.000000e+00 : f32
    %12 = vector.broadcast %cst_11 : f32 to vector<16x16xf32>
    %13 = arith.cmpf ogt, %11, %12 : vector<16x16xf32>
    %cst_12 = arith.constant 2.000000e-01 : f32
    %14 = vector.broadcast %cst_12 : f32 to vector<16x16xf32>
    %15 = arith.mulf %14, %11 : vector<16x16xf32>
    %16 = arith.select %13, %11, %15 : vector<16x16xi1>, vector<16x16xf32>
    %17 = arith.addf %16, %1 : vector<16x16xf32>
    %cst_13 = arith.constant dense<0xFF800000> : vector<16xf32>
    %18 = vector.multi_reduction <maximumf>, %17, %cst_13 [1] : vector<16x16xf32> to vector<16xf32>
    %19 = vector.shape_cast %18 : vector<16xf32> to vector<16x1xf32>
    %20 = vector.broadcast %19 : vector<16x1xf32> to vector<16x16xf32>
    %21 = arith.subf %17, %20 : vector<16x16xf32>
    %22 = math.exp %21 : vector<16x16xf32>
    %cst_14 = arith.constant dense<0.000000e+00> : vector<16xf32>
    %23 = vector.multi_reduction <add>, %22, %cst_14 [1] : vector<16x16xf32> to vector<16xf32>
    %24 = vector.shape_cast %23 : vector<16xf32> to vector<16x1xf32>
    %cst_15 = arith.constant 1.000000e-30 : f32
    %25 = vector.broadcast %cst_15 : f32 to vector<16x1xf32>
    %26 = arith.maximumf %24, %25 : vector<16x1xf32>
    %27 = tpu.reciprocal %26 {approx = true} : vector<16x1xf32> -> vector<16x1xf32>
    %28 = vector.broadcast %27 : vector<16x1xf32> to vector<16x16xf32>
    %29 = arith.mulf %22, %28 : vector<16x16xf32>
    %cst_16 = arith.constant dense<0.000000e+00> : vector<16x16xf32>
    %30 = tpu.matmul %29, %4, %cst_16 {dimension_numbers = #tpu.dot_dimension_numbers<[1], [0], [0], [1], [0, 0, 1, 1], [], []>} : vector<16x16xf32>, vector<16x16xf32>, vector<16x16xf32> -> vector<16x16xf32>
    %31 = vector.extract_strided_slice %3 {offsets = [0, 16], sizes = [16, 16], strides = [1, 1]} : vector<16x32xf32> to vector<16x16xf32>
    %c1 = arith.constant 1 : index
    %c0_17 = arith.constant 0 : index
    %32 = vector.load %arg5[%c1, %c0_17] : memref<2x16xf32, #tpu.memory_space<vmem>>, vector<1x16xf32>
    %c1_18 = arith.constant 1 : index
    %c0_19 = arith.constant 0 : index
    %33 = vector.load %arg6[%c1_18, %c0_19] : memref<2x16xf32, #tpu.memory_space<vmem>>, vector<1x16xf32>
    %cst_20 = arith.constant dense<0.000000e+00> : vector<1x16xf32>
    %34 = tpu.matmul %32, %31, %cst_20 {dimension_numbers = #tpu.dot_dimension_numbers<[1], [1], [0], [0], [0, 0, 1, 0], [], []>} : vector<1x16xf32>, vector<16x16xf32>, vector<1x16xf32> -> vector<1x16xf32>
    %cst_21 = arith.constant dense<0.000000e+00> : vector<16x1xf32>
    %35 = tpu.matmul %31, %33, %cst_21 {dimension_numbers = #tpu.dot_dimension_numbers<[1], [1], [0], [0], [0, 0, 1, 0], [], []>} : vector<16x16xf32>, vector<1x16xf32>, vector<16x1xf32> -> vector<16x1xf32>
    %36 = vector.broadcast %35 : vector<16x1xf32> to vector<16x16xf32>
    %37 = vector.broadcast %34 : vector<1x16xf32> to vector<16x16xf32>
    %38 = arith.addf %36, %37 : vector<16x16xf32>
    %cst_22 = arith.constant 0.000000e+00 : f32
    %39 = vector.broadcast %cst_22 : f32 to vector<16x16xf32>
    %40 = arith.cmpf ogt, %38, %39 : vector<16x16xf32>
    %cst_23 = arith.constant 2.000000e-01 : f32
    %41 = vector.broadcast %cst_23 : f32 to vector<16x16xf32>
    %42 = arith.mulf %41, %38 : vector<16x16xf32>
    %43 = arith.select %40, %38, %42 : vector<16x16xi1>, vector<16x16xf32>
    %44 = arith.addf %43, %1 : vector<16x16xf32>
    %cst_24 = arith.constant dense<0xFF800000> : vector<16xf32>
    %45 = vector.multi_reduction <maximumf>, %44, %cst_24 [1] : vector<16x16xf32> to vector<16xf32>
    %46 = vector.shape_cast %45 : vector<16xf32> to vector<16x1xf32>
    %47 = vector.broadcast %46 : vector<16x1xf32> to vector<16x16xf32>
    %48 = arith.subf %44, %47 : vector<16x16xf32>
    %49 = math.exp %48 : vector<16x16xf32>
    %cst_25 = arith.constant dense<0.000000e+00> : vector<16xf32>
    %50 = vector.multi_reduction <add>, %49, %cst_25 [1] : vector<16x16xf32> to vector<16xf32>
    %51 = vector.shape_cast %50 : vector<16xf32> to vector<16x1xf32>
    %cst_26 = arith.constant 1.000000e-30 : f32
    %52 = vector.broadcast %cst_26 : f32 to vector<16x1xf32>
    %53 = arith.maximumf %51, %52 : vector<16x1xf32>
    %54 = tpu.reciprocal %53 {approx = true} : vector<16x1xf32> -> vector<16x1xf32>
    %55 = vector.broadcast %54 : vector<16x1xf32> to vector<16x16xf32>
    %56 = arith.mulf %49, %55 : vector<16x16xf32>
    %cst_27 = arith.constant dense<0.000000e+00> : vector<16x16xf32>
    %57 = tpu.matmul %56, %31, %cst_27 {dimension_numbers = #tpu.dot_dimension_numbers<[1], [0], [0], [1], [0, 0, 1, 1], [], []>} : vector<16x16xf32>, vector<16x16xf32>, vector<16x16xf32> -> vector<16x16xf32>
    %58 = tpu.concatenate %30, %57 in 1 : vector<16x16xf32>, vector<16x16xf32> -> vector<16x32xf32>
    %c0_28 = arith.constant 0 : index
    %c0_29 = arith.constant 0 : index
    %59 = vector.load %arg7[%c0_28, %c0_29] : memref<1x32xf32, #tpu.memory_space<vmem>>, vector<1x32xf32>
    %60 = vector.broadcast %59 : vector<1x32xf32> to vector<16x32xf32>
    %61 = arith.addf %58, %60 : vector<16x32xf32>
    %cst_30 = arith.constant 0.000000e+00 : f32
    %62 = vector.broadcast %cst_30 : f32 to vector<16x32xf32>
    %63 = arith.cmpf ogt, %61, %62 : vector<16x32xf32>
    %64 = math.exp %61 : vector<16x32xf32>
    %cst_31 = arith.constant 1.000000e+00 : f32
    %65 = vector.broadcast %cst_31 : f32 to vector<16x32xf32>
    %66 = arith.subf %64, %65 : vector<16x32xf32>
    %67 = arith.select %63, %61, %66 : vector<16x32xi1>, vector<16x32xf32>
    %c0_32 = arith.constant 0 : index
    %c0_33 = arith.constant 0 : index
    %68 = vector.load %arg8[%c0_32, %c0_33] : memref<32x8xf32, #tpu.memory_space<vmem>>, vector<32x8xf32>
    %cst_34 = arith.constant dense<0.000000e+00> : vector<16x8xf32>
    %69 = tpu.matmul %67, %68, %cst_34 {dimension_numbers = #tpu.dot_dimension_numbers<[1], [0], [0], [1], [0, 0, 1, 1], [], []>} : vector<16x32xf32>, vector<32x8xf32>, vector<16x8xf32> -> vector<16x8xf32>
    %c0_35 = arith.constant 0 : index
    %c0_36 = arith.constant 0 : index
    %70 = vector.load %arg9[%c0_35, %c0_36] : memref<1x8xf32, #tpu.memory_space<vmem>>, vector<1x8xf32>
    %c0_37 = arith.constant 0 : index
    %c0_38 = arith.constant 0 : index
    %71 = vector.load %arg10[%c0_37, %c0_38] : memref<1x8xf32, #tpu.memory_space<vmem>>, vector<1x8xf32>
    %cst_39 = arith.constant dense<0.000000e+00> : vector<1x16xf32>
    %72 = tpu.matmul %70, %69, %cst_39 {dimension_numbers = #tpu.dot_dimension_numbers<[1], [1], [0], [0], [0, 0, 1, 0], [], []>} : vector<1x8xf32>, vector<16x8xf32>, vector<1x16xf32> -> vector<1x16xf32>
    %cst_40 = arith.constant dense<0.000000e+00> : vector<16x1xf32>
    %73 = tpu.matmul %69, %71, %cst_40 {dimension_numbers = #tpu.dot_dimension_numbers<[1], [1], [0], [0], [0, 0, 1, 0], [], []>} : vector<16x8xf32>, vector<1x8xf32>, vector<16x1xf32> -> vector<16x1xf32>
    %74 = vector.broadcast %73 : vector<16x1xf32> to vector<16x16xf32>
    %75 = vector.broadcast %72 : vector<1x16xf32> to vector<16x16xf32>
    %76 = arith.addf %74, %75 : vector<16x16xf32>
    %cst_41 = arith.constant 0.000000e+00 : f32
    %77 = vector.broadcast %cst_41 : f32 to vector<16x16xf32>
    %78 = arith.cmpf ogt, %76, %77 : vector<16x16xf32>
    %cst_42 = arith.constant 2.000000e-01 : f32
    %79 = vector.broadcast %cst_42 : f32 to vector<16x16xf32>
    %80 = arith.mulf %79, %76 : vector<16x16xf32>
    %81 = arith.select %78, %76, %80 : vector<16x16xi1>, vector<16x16xf32>
    %82 = arith.addf %81, %1 : vector<16x16xf32>
    %cst_43 = arith.constant dense<0xFF800000> : vector<16xf32>
    %83 = vector.multi_reduction <maximumf>, %82, %cst_43 [1] : vector<16x16xf32> to vector<16xf32>
    %84 = vector.shape_cast %83 : vector<16xf32> to vector<16x1xf32>
    %85 = vector.broadcast %84 : vector<16x1xf32> to vector<16x16xf32>
    %86 = arith.subf %82, %85 : vector<16x16xf32>
    %87 = math.exp %86 : vector<16x16xf32>
    %cst_44 = arith.constant dense<0.000000e+00> : vector<16xf32>
    %88 = vector.multi_reduction <add>, %87, %cst_44 [1] : vector<16x16xf32> to vector<16xf32>
    %89 = vector.shape_cast %88 : vector<16xf32> to vector<16x1xf32>
    %cst_45 = arith.constant 1.000000e-30 : f32
    %90 = vector.broadcast %cst_45 : f32 to vector<16x1xf32>
    %91 = arith.maximumf %89, %90 : vector<16x1xf32>
    %92 = tpu.reciprocal %91 {approx = true} : vector<16x1xf32> -> vector<16x1xf32>
    %93 = vector.broadcast %92 : vector<16x1xf32> to vector<16x16xf32>
    %94 = arith.mulf %87, %93 : vector<16x16xf32>
    %cst_46 = arith.constant dense<0.000000e+00> : vector<16x8xf32>
    %95 = tpu.matmul %94, %69, %cst_46 {dimension_numbers = #tpu.dot_dimension_numbers<[1], [0], [0], [1], [0, 0, 1, 1], [], []>} : vector<16x16xf32>, vector<16x8xf32>, vector<16x8xf32> -> vector<16x8xf32>
    %cst_47 = arith.constant 1.000000e+00 : f32
    %96 = vector.broadcast %cst_47 : f32 to vector<16x8xf32>
    %97 = arith.mulf %95, %96 : vector<16x8xf32>
    %c0_48 = arith.constant 0 : index
    %c0_49 = arith.constant 0 : index
    %98 = vector.load %arg11[%c0_48, %c0_49] : memref<1x8xf32, #tpu.memory_space<vmem>>, vector<1x8xf32>
    %99 = vector.broadcast %98 : vector<1x8xf32> to vector<16x8xf32>
    %100 = arith.addf %97, %99 : vector<16x8xf32>
    %cst_50 = arith.constant 0.000000e+00 : f32
    %101 = vector.broadcast %cst_50 : f32 to vector<16x8xf32>
    %102 = arith.cmpf ogt, %100, %101 : vector<16x8xf32>
    %103 = math.exp %100 : vector<16x8xf32>
    %cst_51 = arith.constant 1.000000e+00 : f32
    %104 = vector.broadcast %cst_51 : f32 to vector<16x8xf32>
    %105 = arith.subf %103, %104 : vector<16x8xf32>
    %106 = arith.select %102, %100, %105 : vector<16x8xi1>, vector<16x8xf32>
    %c0_52 = arith.constant 0 : index
    %c0_53 = arith.constant 0 : index
    %107 = vector.load %arg3[%c0_52, %c0_53] : memref<2x16xf32, #tpu.memory_space<vmem>>, vector<2x16xf32>
    %cst_54 = arith.constant dense<0.000000e+00> : vector<2x8xf32>
    %108 = tpu.matmul %107, %106, %cst_54 {dimension_numbers = #tpu.dot_dimension_numbers<[1], [0], [0], [1], [0, 0, 1, 1], [], []>} : vector<2x16xf32>, vector<16x8xf32>, vector<2x8xf32> -> vector<2x8xf32>
    %c0_55 = arith.constant 0 : index
    %c0_56 = arith.constant 0 : index
    %109 = vector.load %arg12[%c0_55, %c0_56] : memref<8x4xf32, #tpu.memory_space<vmem>>, vector<8x4xf32>
    %cst_57 = arith.constant dense<0.000000e+00> : vector<2x4xf32>
    %110 = tpu.matmul %108, %109, %cst_57 {dimension_numbers = #tpu.dot_dimension_numbers<[1], [0], [0], [1], [0, 0, 1, 1], [], []>} : vector<2x8xf32>, vector<8x4xf32>, vector<2x4xf32> -> vector<2x4xf32>
    %c0_58 = arith.constant 0 : index
    %c0_59 = arith.constant 0 : index
    %111 = vector.load %arg13[%c0_58, %c0_59] : memref<1x4xf32, #tpu.memory_space<vmem>>, vector<1x4xf32>
    %112 = vector.broadcast %111 : vector<1x4xf32> to vector<2x4xf32>
    %113 = arith.addf %110, %112 : vector<2x4xf32>
    %c0_60 = arith.constant 0 : index
    %c0_61 = arith.constant 0 : index
    %114 = vector.load %arg14[%c0_60, %c0_61] : memref<2x4xf32, #tpu.memory_space<vmem>>, vector<2x4xf32>
    tpu.vector_store %arg14[%c0_60, %c0_61], %113 {strides = array<i32>} : memref<2x4xf32, #tpu.memory_space<vmem>>, vector<2x4xf32>,
    return
  }
  func.func @transform_0(%arg0: i32) -> (i32, i32) {
    %c0_i32 = arith.constant 0 : i32
    %c0_i32_0 = arith.constant 0 : i32
    %c0_i32_1 = arith.constant 0 : i32
    return %c0_i32, %c0_i32_0 : i32, i32
  }
  func.func @transform_1(%arg0: i32) -> (i32, i32) {
    %c0_i32 = arith.constant 0 : i32
    %c0_i32_0 = arith.constant 0 : i32
    %c0_i32_1 = arith.constant 0 : i32
    return %c0_i32, %c0_i32_0 : i32, i32
  }
  func.func @transform_2(%arg0: i32) -> (i32, i32) {
    %c0_i32 = arith.constant 0 : i32
    %c0_i32_0 = arith.constant 0 : i32
    %c0_i32_1 = arith.constant 0 : i32
    return %c0_i32, %c0_i32_0 : i32, i32
  }
  func.func @transform_3(%arg0: i32) -> (i32, i32) {
    %c0_i32 = arith.constant 0 : i32
    %c0_i32_0 = arith.constant 0 : i32
    %c0_i32_1 = arith.constant 0 : i32
    return %c0_i32, %c0_i32_0 : i32, i32
  }
  func.func @transform_4(%arg0: i32) -> (i32, i32) {
    %c0_i32 = arith.constant 0 : i32
    %c0_i32_0 = arith.constant 0 : i32
    %c0_i32_1 = arith.constant 0 : i32
    return %c0_i32, %c0_i32_0 : i32, i32
  }
  func.func @transform_5(%arg0: i32) -> (i32, i32) {
    %c0_i32 = arith.constant 0 : i32
    %c0_i32_0 = arith.constant 0 : i32
    %c0_i32_1 = arith.constant 0 : i32
    return %c0_i32, %c0_i32_0 : i32, i32
  }
  func.func @transform_6(%arg0: i32) -> (i32, i32) {
    %c0_i32 = arith.constant 0 : i32
    %c0_i32_0 = arith.constant 0 : i32
    %c0_i32_1 = arith.constant 0 : i32
    return %c0_i32, %c0_i32_0 : i32, i32
  }
  func.func @transform_7(%arg0: i32) -> (i32, i32) {
    %c0_i32 = arith.constant 0 : i32
    %c0_i32_0 = arith.constant 0 : i32
    %c0_i32_1 = arith.constant 0 : i32
    return %c0_i32, %c0_i32_0 : i32, i32
  }
  func.func @transform_8(%arg0: i32) -> (i32, i32) {
    %c0_i32 = arith.constant 0 : i32
    %c0_i32_0 = arith.constant 0 : i32
    %c0_i32_1 = arith.constant 0 : i32
    return %c0_i32, %c0_i32_0 : i32, i32
  }
  func.func @transform_9(%arg0: i32) -> (i32, i32) {
    %c0_i32 = arith.constant 0 : i32
    %c0_i32_0 = arith.constant 0 : i32
    %c0_i32_1 = arith.constant 0 : i32
    return %c0_i32, %c0_i32_0 : i32, i32
  }
  func.func @transform_10(%arg0: i32) -> (i32, i32) {
    %c0_i32 = arith.constant 0 : i32
    %c0_i32_0 = arith.constant 0 : i32
    %c0_i32_1 = arith.constant 0 : i32
    return %c0_i32, %c0_i32_0 : i32, i32
  }
  func.func @transform_11(%arg0: i32) -> (i32, i32) {
    %c0_i32 = arith.constant 0 : i32
    %c0_i32_0 = arith.constant 0 : i32
    %c0_i32_1 = arith.constant 0 : i32
    return %c0_i32, %c0_i32_0 : i32, i32
  }
  func.func @transform_12(%arg0: i32) -> (i32, i32) {
    %c0_i32 = arith.constant 0 : i32
    %c0_i32_0 = arith.constant 0 : i32
    %c0_i32_1 = arith.constant 0 : i32
    return %c0_i32, %c0_i32_0 : i32, i32
  }
  func.func @transform_13(%arg0: i32) -> (i32, i32) {
    %c0_i32 = arith.constant 0 : i32
    %c0_i32_0 = arith.constant 0 : i32
    %c0_i32_1 = arith.constant 0 : i32
    return %c0_i32, %c0_i32_0 : i32, i32
  }
}

</mosaic_0001>

<llo_original>
// kernel: tpu_custom_call.1
$region0: #{tpu_custom_call.1}
  #allocation0 [shape = 'u32[]', space=smem, size = 0x4, offset = 0x4, fixed_abs, tag = 'smem constant byte address 0x4 - core index']
  #allocation1 [shape = 'u32[144,128]{1,0:T(1,128)}', space=vmem, size = 0x12000, scoped, tag = 'internal scratch']
  %s0 = inlined_call_operand.vmem [shape: f32[16,8], index: 0, kind: input, shape index: {}]
  %s1 = inlined_call_operand.vmem [shape: f32[16,16], index: 1, kind: input, shape index: {}]
  %s2 = inlined_call_operand.vmem [shape: f32[2,16], index: 2, kind: input, shape index: {}]
  %s3 = inlined_call_operand.vmem [shape: f32[8,32], index: 3, kind: input, shape index: {}]
  %s4 = inlined_call_operand.vmem [shape: f32[2,16], index: 4, kind: input, shape index: {}]
  %s5 = inlined_call_operand.vmem [shape: f32[2,16], index: 5, kind: input, shape index: {}]
  %s6 = inlined_call_operand.vmem [shape: f32[1,32], index: 6, kind: input, shape index: {}]
  %s7 = inlined_call_operand.vmem [shape: f32[32,8], index: 7, kind: input, shape index: {}]
  %s8 = inlined_call_operand.vmem [shape: f32[1,8], index: 8, kind: input, shape index: {}]
  %s9 = inlined_call_operand.vmem [shape: f32[1,8], index: 9, kind: input, shape index: {}]
  %s10 = inlined_call_operand.vmem [shape: f32[1,8], index: 10, kind: input, shape index: {}]
  %s11 = inlined_call_operand.vmem [shape: f32[8,4], index: 11, kind: input, shape index: {}]
  %s12 = inlined_call_operand.vmem [shape: f32[1,4], index: 12, kind: input, shape index: {}]
  %s13 = inlined_call_operand.hbm [shape: f32[2,4], index: 13, kind: output, shape index: {}]
  %s14 = sld [smem:[#allocation0]]
  $region62: #{tpu_custom_call.1} parent=0
    _
  %s16 = ssub.s32 1, %s14
  %s17 = scalar_select 0, %s16, %s14
  $region1: #{tpu_custom_call.1} parent=0
    #allocation2 [shape = 'u8[1024]{0}', space=vmem, size = 0x400, scoped, tag = 'output window, operand 0, single buffered']
    #allocation3 [shape = 's32[1]{0}', space=sflag, size = 0x4, scoped, tag = 'scoped memory for tpu_custom_call.1']
    %18 = vsyncpa [#allocation3], 0
    // Predicated region
    $region2: #{tpu_custom_call.1} parent=1 // pred_check
      _
    $region3: #{tpu_custom_call.1} parent=1 // pred_check_branch
      %20 = sbr.rel (0) target = $region5
    $region4: #{tpu_custom_call.1} parent=1 // pred_region
      _
    $region5: #{tpu_custom_call.1} parent=1 // pred_fallthru
      _
    // Predicated region
    $region6: #{tpu_custom_call.1} parent=1 // pred_check
      _
    $region7: #{tpu_custom_call.1} parent=1 // pred_check_branch
      %22 = sbr.rel (0) target = $region9
    $region8: #{tpu_custom_call.1} parent=1 // pred_region
      _
    $region9: #{tpu_custom_call.1} parent=1 // pred_fallthru
      _
    // Predicated region
    $region10: #{tpu_custom_call.1} parent=1 // pred_check
      _
    $region11: #{tpu_custom_call.1} parent=1 // pred_check_branch
      %24 = sbr.rel (0) target = $region13
    $region12: #{tpu_custom_call.1} parent=1 // pred_region
      _
    $region13: #{tpu_custom_call.1} parent=1 // pred_fallthru
      _
    // Predicated region
    $region14: #{tpu_custom_call.1} parent=1 // pred_check
      _
    $region15: #{tpu_custom_call.1} parent=1 // pred_check_branch
      %26 = sbr.rel (0) target = $region17
    $region16: #{tpu_custom_call.1} parent=1 // pred_region
      _
    $region17: #{tpu_custom_call.1} parent=1 // pred_fallthru
      _
    // Predicated region
    $region18: #{tpu_custom_call.1} parent=1 // pred_check
      _
    $region19: #{tpu_custom_call.1} parent=1 // pred_check_branch
      %28 = sbr.rel (0) target = $region21
    $region20: #{tpu_custom_call.1} parent=1 // pred_region
      _
    $region21: #{tpu_custom_call.1} parent=1 // pred_fallthru
      _
    // Predicated region
    $region22: #{tpu_custom_call.1} parent=1 // pred_check
      _
    $region23: #{tpu_custom_call.1} parent=1 // pred_check_branch
      %30 = sbr.rel (0) target = $region25
    $region24: #{tpu_custom_call.1} parent=1 // pred_region
      _
    $region25: #{tpu_custom_call.1} parent=1 // pred_fallthru
      _
    // Predicated region
    $region26: #{tpu_custom_call.1} parent=1 // pred_check
      _
    $region27: #{tpu_custom_call.1} parent=1 // pred_check_branch
      %32 = sbr.rel (0) target = $region29
    $region28: #{tpu_custom_call.1} parent=1 // pred_region
      _
    $region29: #{tpu_custom_call.1} parent=1 // pred_fallthru
      _
    // Predicated region
    $region30: #{tpu_custom_call.1} parent=1 // pred_check
      _
    $region31: #{tpu_custom_call.1} parent=1 // pred_check_branch
      %34 = sbr.rel (0) target = $region33
    $region32: #{tpu_custom_call.1} parent=1 // pred_region
      _
    $region33: #{tpu_custom_call.1} parent=1 // pred_fallthru
      _
    // Predicated region
    $region34: #{tpu_custom_call.1} parent=1 // pred_check
      _
    $region35: #{tpu_custom_call.1} parent=1 // pred_check_branch
      %36 = sbr.rel (0) target = $region37
    $region36: #{tpu_custom_call.1} parent=1 // pred_region
      _
    $region37: #{tpu_custom_call.1} parent=1 // pred_fallthru
      _
    // Predicated region
    $region38: #{tpu_custom_call.1} parent=1 // pred_check
      _
    $region39: #{tpu_custom_call.1} parent=1 // pred_check_branch
      %38 = sbr.rel (0) target = $region41
    $region40: #{tpu_custom_call.1} parent=1 // pred_region
      _
    $region41: #{tpu_custom_call.1} parent=1 // pred_fallthru
      _
    // Predicated region
    $region42: #{tpu_custom_call.1} parent=1 // pred_check
      _
    $region43: #{tpu_custom_call.1} parent=1 // pred_check_branch
      %40 = sbr.rel (0) target = $region45
    $region44: #{tpu_custom_call.1} parent=1 // pred_region
      _
    $region45: #{tpu_custom_call.1} parent=1 // pred_fallthru
      _
    // Predicated region
    $region46: #{tpu_custom_call.1} parent=1 // pred_check
      _
    $region47: #{tpu_custom_call.1} parent=1 // pred_check_branch
      %42 = sbr.rel (0) target = $region49
    $region48: #{tpu_custom_call.1} parent=1 // pred_region
      _
    $region49: #{tpu_custom_call.1} parent=1 // pred_fallthru
      _
    // Predicated region
    $region50: #{tpu_custom_call.1} parent=1 // pred_check
      _
    $region51: #{tpu_custom_call.1} parent=1 // pred_check_branch
      %44 = sbr.rel (0) target = $region53
    $region52: #{tpu_custom_call.1} parent=1 // pred_region
      _
    $region53: #{tpu_custom_call.1} parent=1 // pred_fallthru
      _
    %v45 = vld [vmem:[%s0] sm:$0xff]
    %v46 = vld [vmem:[%s0 + $0x8] sm:$0xff]
    %v47 = vld [vmem:[%s1] sm:$0xff]
    %v48 = vld [vmem:[%s1 + $0x8] sm:$0xff]
    %v49 = vld [vmem:[%s3] sm:$0xff]
    %vm50 = vcmask 64512
    %v52 = vsel %vm50, %v45, 0
    %v55 = vsel %vm50, %v46, 0
    %57 = vmatprep.subr.mxu0 0.0
    %58 = vmatpush1.msra.mxu0 %v49
    %59 = vmatprep.subr.mxu0 0.0
    %60 = vmatpush1.msra.mxu0 0.0
    %61 = vmatprep.subr.mxu0 0.0
    %62 = vmatpush1.msra.mxu0 0.0
    %63 = vmatprep.subr.mxu0 0.0
    %64 = vmatpush1.msra.mxu0 0.0
    %65 = vmatprep.subr.mxu0 0.0
    %66 = vmatpush1.msra.mxu0 0.0
    %67 = vmatprep.subr.mxu0 0.0
    %68 = vmatpush1.msra.mxu0 0.0
    %69 = vmatprep.subr.mxu0 0.0
    %70 = vmatpush1.msra.mxu0 0.0
    %71 = vmatprep.subr.mxu0 0.0
    %72 = vmatpush1.msra.mxu0 0.0
    %73 = vmatprep.subr.mxu0 0.0
    %74 = vmatpush1.msra.mxu0 0.0
    %75 = vmatprep.subr.mxu0 0.0
    %76 = vmatpush1.msra.mxu0 0.0
    %77 = vmatprep.subr.mxu0 0.0
    %78 = vmatpush1.msra.mxu0 0.0
    %79 = vmatprep.subr.mxu0 0.0
    %80 = vmatpush1.msra.mxu0 0.0
    %81 = vmatprep.subr.mxu0 0.0
    %82 = vmatpush1.msra.mxu0 0.0
    %83 = vmatprep.subr.mxu0 0.0
    %84 = vmatpush1.msra.mxu0 0.0
    %85 = vmatprep.subr.mxu0 0.0
    %86 = vmatpush1.msra.mxu0 0.0
    %87 = vmatprep.subr.mxu0 0.0
    %88 = vmatpush1.msra.mxu0 0.0
    %89 = vmatprep.subr.mxu0 0.0
    %90 = vmatpush1.msra.mxu0 0.0
    %91 = vmatprep.subr.mxu0 0.0
    %92 = vmatpush1.msra.mxu0 0.0
    %93 = vmatprep.subr.mxu0 0.0
    %94 = vmatpush1.msra.mxu0 0.0
    %95 = vmatprep.subr.mxu0 0.0
    %96 = vmatpush1.msra.mxu0 0.0
    %97 = vmatprep.subr.mxu0 0.0
    %98 = vmatpush1.msra.mxu0 0.0
    %99 = vmatprep.subr.mxu0 0.0
    %100 = vmatpush1.msra.mxu0 0.0
    %101 = vmatprep.subr.mxu0 0.0
    %102 = vmatpush1.msra.mxu0 0.0
    %103 = vmatprep.subr.mxu0 0.0
    %104 = vmatpush1.msra.mxu0 0.0
    %105 = vmatprep.subr.mxu0 0.0
    %106 = vmatpush1.msra.mxu0 0.0
    %107 = vmatprep.subr.mxu0 0.0
    %108 = vmatpush1.msra.mxu0 0.0
    %109 = vmatprep.subr.mxu0 0.0
    %110 = vmatpush1.msra.mxu0 0.0
    %111 = vmatprep.subr.mxu0 0.0
    %112 = vmatpush1.msra.mxu0 0.0
    %113 = vmatprep.subr.mxu0 0.0
    %114 = vmatpush1.msra.mxu0 0.0
    %115 = vmatprep.subr.mxu0 0.0
    %116 = vmatpush1.msra.mxu0 0.0
    %117 = vmatprep.subr.mxu0 0.0
    %118 = vmatpush1.msra.mxu0 0.0
    %119 = vmatprep.subr.mxu0 0.0
    %120 = vmatpush1.msra.mxu0 0.0
    %121 = vmatprep.mubr.f32.mxu0 0.0
    %122 = vmatmul.mubr.f32.gmra.mrb[0].mxu0 %v52
    %v123 = vpop.f32.mrb[0].mxu0
    %v124 = vadd.f32 0.0, %v123
    %v125 = vpop.f32.mrb[0].mxu0
    %126 = vmatprep.mubr.f32.mxu0 0.0
    %127 = vmatmul.mubr.f32.gmra.mrb[0].mxu0 %v55
    %v128 = vpop.f32.mrb[0].mxu0
    %v129 = vadd.f32 0.0, %v128
    %v130 = vpop.f32.mrb[0].mxu0
    %131 = vdwg.mxu0
    %v132 = vld [vmem:[%s4] sm:$0x1]
    %v133 = vld [vmem:[%s5] sm:$0x1]
    %vm134 = vcmask 130048
    %v136 = vsel %vm134, %v132, 0
    %v139 = vsel %vm134, %v124, 0
    %v142 = vsel %vm134, %v129, 0
    %144 = vmatprep.subr.mxu0 0.0
    %145 = vmatpush1.xpose.msra.mxu0 %v139
    %146 = vmatprep.subr.mxu0 0.0
    %147 = vmatpush1.xpose.msra.mxu0 %v142
    %148 = vmatprep.subr.mxu0 0.0
    %149 = vmatpush1.xpose.msra.mxu0 0.0
    %150 = vmatprep.subr.mxu0 0.0
    %151 = vmatpush1.xpose.msra.mxu0 0.0
    %152 = vmatprep.subr.mxu0 0.0
    %153 = vmatpush1.xpose.msra.mxu0 0.0
    %154 = vmatprep.subr.mxu0 0.0
    %155 = vmatpush1.xpose.msra.mxu0 0.0
    %156 = vmatprep.subr.mxu0 0.0
    %157 = vmatpush1.xpose.msra.mxu0 0.0
    %158 = vmatprep.subr.mxu0 0.0
    %159 = vmatpush1.xpose.msra.mxu0 0.0
    %160 = vmatprep.subr.mxu0 0.0
    %161 = vmatpush1.xpose.msra.mxu0 0.0
    %162 = vmatprep.subr.mxu0 0.0
    %163 = vmatpush1.xpose.msra.mxu0 0.0
    %164 = vmatprep.subr.mxu0 0.0
    %165 = vmatpush1.xpose.msra.mxu0 0.0
    %166 = vmatprep.subr.mxu0 0.0
    %167 = vmatpush1.xpose.msra.mxu0 0.0
    %168 = vmatprep.subr.mxu0 0.0
    %169 = vmatpush1.xpose.msra.mxu0 0.0
    %170 = vmatprep.subr.mxu0 0.0
    %171 = vmatpush1.xpose.msra.mxu0 0.0
    %172 = vmatprep.subr.mxu0 0.0
    %173 = vmatpush1.xpose.msra.mxu0 0.0
    %174 = vmatprep.subr.mxu0 0.0
    %175 = vmatpush1.xpose.msra.mxu0 0.0
    %176 = vmatprep.subr.mxu0 0.0
    %177 = vmatpush1.xpose.msra.mxu0 0.0
    %178 = vmatprep.subr.mxu0 0.0
    %179 = vmatpush1.xpose.msra.mxu0 0.0
    %180 = vmatprep.subr.mxu0 0.0
    %181 = vmatpush1.xpose.msra.mxu0 0.0
    %182 = vmatprep.subr.mxu0 0.0
    %183 = vmatpush1.xpose.msra.mxu0 0.0
    %184 = vmatprep.subr.mxu0 0.0
    %185 = vmatpush1.xpose.msra.mxu0 0.0
    %186 = vmatprep.subr.mxu0 0.0
    %187 = vmatpush1.xpose.msra.mxu0 0.0
    %188 = vmatprep.subr.mxu0 0.0
    %189 = vmatpush1.xpose.msra.mxu0 0.0
    %190 = vmatprep.subr.mxu0 0.0
    %191 = vmatpush1.xpose.msra.mxu0 0.0
    %192 = vmatprep.subr.mxu0 0.0
    %193 = vmatpush1.xpose.msra.mxu0 0.0
    %194 = vmatprep.subr.mxu0 0.0
    %195 = vmatpush1.xpose.msra.mxu0 0.0
    %196 = vmatprep.subr.mxu0 0.0
    %197 = vmatpush1.xpose.msra.mxu0 0.0
    %198 = vmatprep.subr.mxu0 0.0
    %199 = vmatpush1.xpose.msra.mxu0 0.0
    %200 = vmatprep.subr.mxu0 0.0
    %201 = vmatpush1.xpose.msra.mxu0 0.0
    %202 = vmatprep.subr.mxu0 0.0
    %203 = vmatpush1.xpose.msra.mxu0 0.0
    %204 = vmatprep.subr.mxu0 0.0
    %205 = vmatpush1.xpose.msra.mxu0 0.0
    %206 = vmatprep.subr.mxu0 0.0
    %207 = vmatpush1.xpose.msra.mxu0 0.0
    %208 = vmatprep.mubr.f32.mxu0 0.0
    %209 = vmatmul.mubr.f32.gmra.mrb[0].mxu0 %v136
    %v210 = vpop.f32.mrb[0].mxu0
    %v211 = vadd.f32 0.0, %v210
    %v212 = vpop.f32.mrb[0].mxu0
    %213 = vdwg.mxu0
    %v214 = vlaneseq
    %v215 = vshrl.u32 %v214, 7
    %v216 = vsub.s32 0, %v215
    %v217 = vrot.slane %v133, %v216
    %v218 = vmul.f32 %v124, %v217
    %v219 = vmul.f32 %v129, %v217
    %v220 = vsel %vm134, %v218, 0.0
    %221 = vadd.xlane.f32.xlu0 %v220
    %v222 = vpop.xlane.xlu0 %221
    %v223 = vsel %vm134, %v219, 0.0
    %224 = vadd.xlane.f32.xlu0 %v223
    %v225 = vpop.xlane.xlu0 %224
    %v226 = vlaneseq
    %v227 = vshrl.u32 %v226, 7
    %v228 = vsub.s32 0, %v227
    %v229 = vrot.slane %v211, %v228
    %v230 = vadd.f32 %v222, %v229
    %v231 = vadd.f32 %v225, %v229
    %vm232 = vcmp.gt.f32.partialorder %v230, 0.0
    %vm233 = vcmp.gt.f32.partialorder %v231, 0.0
    %v234 = vmul.f32 %v230, 0.2
    %v235 = vmul.f32 %v231, 0.2
    %v236 = vsel %vm232, %v230, %v234
    %v237 = vsel %vm233, %v231, %v235
    %v238 = vadd.f32 %v236, %v47
    %v239 = vadd.f32 %v237, %v48
    %v240 = vsel %vm134, %v238, -inf
    %241 = vmax.xlane.f32.xlu0 %v240
    %v242 = vpop.xlane.xlu0 %241
    %v243 = vsel %vm134, %v239, -inf
    %244 = vmax.xlane.f32.xlu0 %v243
    %v245 = vpop.xlane.xlu0 %244
    %v246 = vsub.f32 %v238, %v242
    %v247 = vsub.f32 %v239, %v245
    %v248 = vmul.f32 %v246, 1.442695
    %v249 = vpow.pop %v248
    %v250 = vmul.f32 %v247, 1.442695
    %v251 = vpow.pop %v250
    %v252 = vsel %vm134, %v249, 0.0
    %253 = vadd.xlane.f32.xlu0 %v252
    %v254 = vpop.xlane.xlu0 %253
    %v255 = vsel %vm134, %v251, 0.0
    %256 = vadd.xlane.f32.xlu0 %v255
    %v257 = vpop.xlane.xlu0 %256
    %v258 = vmax.f32 %v254, 1e-30
    %v259 = vmax.f32 %v257, 1e-30
    %v260 = vrcp.pop %v258
    %v261 = vrcp.pop %v259
    %v262 = vmul.f32 %v249, %v260
    %v263 = vmul.f32 %v251, %v261
    %v265 = vsel %vm134, %v262, 0
    %v268 = vsel %vm134, %v263, 0
    %270 = vmatprep.subr.mxu0 0.0
    %271 = vmatpush1.msra.mxu0 %v124
    %272 = vmatprep.subr.mxu0 0.0
    %273 = vmatpush1.msra.mxu0 %v129
    %274 = vmatprep.subr.mxu0 0.0
    %275 = vmatpush1.msra.mxu0 0.0
    %276 = vmatprep.subr.mxu0 0.0
    %277 = vmatpush1.msra.mxu0 0.0
    %278 = vmatprep.subr.mxu0 0.0
    %279 = vmatpush1.msra.mxu0 0.0
    %280 = vmatprep.subr.mxu0 0.0
    %281 = vmatpush1.msra.mxu0 0.0
    %282 = vmatprep.subr.mxu0 0.0
    %283 = vmatpush1.msra.mxu0 0.0
    %284 = vmatprep.subr.mxu0 0.0
    %285 = vmatpush1.msra.mxu0 0.0
    %286 = vmatprep.subr.mxu0 0.0
    %287 = vmatpush1.msra.mxu0 0.0
    %288 = vmatprep.subr.mxu0 0.0
    %289 = vmatpush1.msra.mxu0 0.0
    %290 = vmatprep.subr.mxu0 0.0
    %291 = vmatpush1.msra.mxu0 0.0
    %292 = vmatprep.subr.mxu0 0.0
    %293 = vmatpush1.msra.mxu0 0.0
    %294 = vmatprep.subr.mxu0 0.0
    %295 = vmatpush1.msra.mxu0 0.0
    %296 = vmatprep.subr.mxu0 0.0
    %297 = vmatpush1.msra.mxu0 0.0
    %298 = vmatprep.subr.mxu0 0.0
    %299 = vmatpush1.msra.mxu0 0.0
    %300 = vmatprep.subr.mxu0 0.0
    %301 = vmatpush1.msra.mxu0 0.0
    %302 = vmatprep.subr.mxu0 0.0
    %303 = vmatpush1.msra.mxu0 0.0
    %304 = vmatprep.subr.mxu0 0.0
    %305 = vmatpush1.msra.mxu0 0.0
    %306 = vmatprep.subr.mxu0 0.0
    %307 = vmatpush1.msra.mxu0 0.0
    %308 = vmatprep.subr.mxu0 0.0
    %309 = vmatpush1.msra.mxu0 0.0
    %310 = vmatprep.subr.mxu0 0.0
    %311 = vmatpush1.msra.mxu0 0.0
    %312 = vmatprep.subr.mxu0 0.0
    %313 = vmatpush1.msra.mxu0 0.0
    %314 = vmatprep.subr.mxu0 0.0
    %315 = vmatpush1.msra.mxu0 0.0
    %316 = vmatprep.subr.mxu0 0.0
    %317 = vmatpush1.msra.mxu0 0.0
    %318 = vmatprep.subr.mxu0 0.0
    %319 = vmatpush1.msra.mxu0 0.0
    %320 = vmatprep.subr.mxu0 0.0
    %321 = vmatpush1.msra.mxu0 0.0
    %322 = vmatprep.subr.mxu0 0.0
    %323 = vmatpush1.msra.mxu0 0.0
    %324 = vmatprep.subr.mxu0 0.0
    %325 = vmatpush1.msra.mxu0 0.0
    %326 = vmatprep.subr.mxu0 0.0
    %327 = vmatpush1.msra.mxu0 0.0
    %328 = vmatprep.subr.mxu0 0.0
    %329 = vmatpush1.msra.mxu0 0.0
    %330 = vmatprep.subr.mxu0 0.0
    %331 = vmatpush1.msra.mxu0 0.0
    %332 = vmatprep.subr.mxu0 0.0
    %333 = vmatpush1.msra.mxu0 0.0
    %334 = vmatprep.mubr.f32.mxu0 0.0
    %335 = vmatmul.mubr.f32.gmra.mrb[0].mxu0 %v265
    %v336 = vpop.f32.mrb[0].mxu0
    %v337 = vadd.f32 0.0, %v336
    %v338 = vpop.f32.mrb[0].mxu0
    %339 = vmatprep.mubr.f32.mxu0 0.0
    %340 = vmatmul.mubr.f32.gmra.mrb[0].mxu0 %v268
    %v341 = vpop.f32.mrb[0].mxu0
    %v342 = vadd.f32 0.0, %v341
    %v343 = vpop.f32.mrb[0].mxu0
    %344 = vdwg.mxu0
    %v345 = vld [vmem:[%s4 + $0x1] sm:$0x1]
    %v346 = vld [vmem:[%s5 + $0x1] sm:$0x1]
    %347 = vrot.lane.b32.xlu0 %v124, 112
    %v348 = vpop.permute.xlu0 %347
    %349 = vrot.lane.b32.xlu0 %v129, 112
    %v350 = vpop.permute.xlu0 %349
    %v352 = vsel %vm134, %v345, 0
    %v354 = vsel %vm134, %v348, 0
    %v356 = vsel %vm134, %v350, 0
    %358 = vmatprep.subr.mxu0 0.0
    %359 = vmatpush1.xpose.msra.mxu0 %v354
    %360 = vmatprep.subr.mxu0 0.0
    %361 = vmatpush1.xpose.msra.mxu0 %v356
    %362 = vmatprep.subr.mxu0 0.0
    %363 = vmatpush1.xpose.msra.mxu0 0.0
    %364 = vmatprep.subr.mxu0 0.0
    %365 = vmatpush1.xpose.msra.mxu0 0.0
    %366 = vmatprep.subr.mxu0 0.0
    %367 = vmatpush1.xpose.msra.mxu0 0.0
    %368 = vmatprep.subr.mxu0 0.0
    %369 = vmatpush1.xpose.msra.mxu0 0.0
    %370 = vmatprep.subr.mxu0 0.0
    %371 = vmatpush1.xpose.msra.mxu0 0.0
    %372 = vmatprep.subr.mxu0 0.0
    %373 = vmatpush1.xpose.msra.mxu0 0.0
    %374 = vmatprep.subr.mxu0 0.0
    %375 = vmatpush1.xpose.msra.mxu0 0.0
    %376 = vmatprep.subr.mxu0 0.0
    %377 = vmatpush1.xpose.msra.mxu0 0.0
    %378 = vmatprep.subr.mxu0 0.0
    %379 = vmatpush1.xpose.msra.mxu0 0.0
    %380 = vmatprep.subr.mxu0 0.0
    %381 = vmatpush1.xpose.msra.mxu0 0.0
    %382 = vmatprep.subr.mxu0 0.0
    %383 = vmatpush1.xpose.msra.mxu0 0.0
    %384 = vmatprep.subr.mxu0 0.0
    %385 = vmatpush1.xpose.msra.mxu0 0.0
    %386 = vmatprep.subr.mxu0 0.0
    %387 = vmatpush1.xpose.msra.mxu0 0.0
    %388 = vmatprep.subr.mxu0 0.0
    %389 = vmatpush1.xpose.msra.mxu0 0.0
    %390 = vmatprep.subr.mxu0 0.0
    %391 = vmatpush1.xpose.msra.mxu0 0.0
    %392 = vmatprep.subr.mxu0 0.0
    %393 = vmatpush1.xpose.msra.mxu0 0.0
    %394 = vmatprep.subr.mxu0 0.0
    %395 = vmatpush1.xpose.msra.mxu0 0.0
    %396 = vmatprep.subr.mxu0 0.0
    %397 = vmatpush1.xpose.msra.mxu0 0.0
    %398 = vmatprep.subr.mxu0 0.0
    %399 = vmatpush1.xpose.msra.mxu0 0.0
    %400 = vmatprep.subr.mxu0 0.0
    %401 = vmatpush1.xpose.msra.mxu0 0.0
    %402 = vmatprep.subr.mxu0 0.0
    %403 = vmatpush1.xpose.msra.mxu0 0.0
    %404 = vmatprep.subr.mxu0 0.0
    %405 = vmatpush1.xpose.msra.mxu0 0.0
    %406 = vmatprep.subr.mxu0 0.0
    %407 = vmatpush1.xpose.msra.mxu0 0.0
    %408 = vmatprep.subr.mxu0 0.0
    %409 = vmatpush1.xpose.msra.mxu0 0.0
    %410 = vmatprep.subr.mxu0 0.0
    %411 = vmatpush1.xpose.msra.mxu0 0.0
    %412 = vmatprep.subr.mxu0 0.0
    %413 = vmatpush1.xpose.msra.mxu0 0.0
    %414 = vmatprep.subr.mxu0 0.0
    %415 = vmatpush1.xpose.msra.mxu0 0.0
    %416 = vmatprep.subr.mxu0 0.0
    %417 = vmatpush1.xpose.msra.mxu0 0.0
    %418 = vmatprep.subr.mxu0 0.0
    %419 = vmatpush1.xpose.msra.mxu0 0.0
    %420 = vmatprep.subr.mxu0 0.0
    %421 = vmatpush1.xpose.msra.mxu0 0.0
    %422 = vmatprep.mubr.f32.mxu0 0.0
    %423 = vmatmul.mubr.f32.gmra.mrb[0].mxu0 %v352
    %v424 = vpop.f32.mrb[0].mxu0
    %v425 = vadd.f32 0.0, %v424
    %v426 = vpop.f32.mrb[0].mxu0
    %427 = vdwg.mxu0
    %v428 = vlaneseq
    %v429 = vshrl.u32 %v428, 7
    %v430 = vsub.s32 0, %v429
    %v431 = vrot.slane %v346, %v430
    %433 = vrot.lane.b32.xlu0 %v431, 16
    %v434 = vpop.permute.xlu0 %433
    %v436 = vmul.f32 %v124, %v434
    %v437 = vmul.f32 %v129, %v434
    %440 = vrot.lane.b32.xlu0 %v436, 112
    %v441 = vpop.permute.xlu0 %440
    %442 = vrot.lane.b32.xlu0 %v437, 112
    %v443 = vpop.permute.xlu0 %442
    %v446 = vsel %vm134, %v441, 0.0
    %447 = vadd.xlane.f32.xlu0 %v446
    %v448 = vpop.xlane.xlu0 %447
    %v449 = vsel %vm134, %v443, 0.0
    %450 = vadd.xlane.f32.xlu0 %v449
    %v451 = vpop.xlane.xlu0 %450
    %v452 = vlaneseq
    %v453 = vshrl.u32 %v452, 7
    %v454 = vsub.s32 0, %v453
    %v455 = vrot.slane %v425, %v454
    %v456 = vadd.f32 %v448, %v455
    %v457 = vadd.f32 %v451, %v455
    %vm458 = vcmp.gt.f32.partialorder %v456, 0.0
    %vm459 = vcmp.gt.f32.partialorder %v457, 0.0
    %v460 = vmul.f32 %v456, 0.2
    %v461 = vmul.f32 %v457, 0.2
    %v462 = vsel %vm458, %v456, %v460
    %v463 = vsel %vm459, %v457, %v461
    %v464 = vadd.f32 %v462, %v47
    %v465 = vadd.f32 %v463, %v48
    %v466 = vsel %vm134, %v464, -inf
    %467 = vmax.xlane.f32.xlu0 %v466
    %v468 = vpop.xlane.xlu0 %467
    %v469 = vsel %vm134, %v465, -inf
    %470 = vmax.xlane.f32.xlu0 %v469
    %v471 = vpop.xlane.xlu0 %470
    %v472 = vsub.f32 %v464, %v468
    %v473 = vsub.f32 %v465, %v471
    %v474 = vmul.f32 %v472, 1.442695
    %v475 = vpow.pop %v474
    %v476 = vmul.f32 %v473, 1.442695
    %v477 = vpow.pop %v476
    %v478 = vsel %vm134, %v475, 0.0
    %479 = vadd.xlane.f32.xlu0 %v478
    %v480 = vpop.xlane.xlu0 %479
    %v481 = vsel %vm134, %v477, 0.0
    %482 = vadd.xlane.f32.xlu0 %v481
    %v483 = vpop.xlane.xlu0 %482
    %v484 = vmax.f32 %v480, 1e-30
    %v485 = vmax.f32 %v483, 1e-30
    %v486 = vrcp.pop %v484
    %v487 = vrcp.pop %v485
    %v488 = vmul.f32 %v475, %v486
    %v489 = vmul.f32 %v477, %v487
    %v493 = vsel %vm134, %v488, 0
    %v496 = vsel %vm134, %v489, 0
    %498 = vmatprep.subr.mxu0 0.0
    %499 = vmatpush1.msra.mxu0 %v348
    %500 = vmatprep.subr.mxu0 0.0
    %501 = vmatpush1.msra.mxu0 %v350
    %502 = vmatprep.subr.mxu0 0.0
    %503 = vmatpush1.msra.mxu0 0.0
    %504 = vmatprep.subr.mxu0 0.0
    %505 = vmatpush1.msra.mxu0 0.0
    %506 = vmatprep.subr.mxu0 0.0
    %507 = vmatpush1.msra.mxu0 0.0
    %508 = vmatprep.subr.mxu0 0.0
    %509 = vmatpush1.msra.mxu0 0.0
    %510 = vmatprep.subr.mxu0 0.0
    %511 = vmatpush1.msra.mxu0 0.0
    %512 = vmatprep.subr.mxu0 0.0
    %513 = vmatpush1.msra.mxu0 0.0
    %514 = vmatprep.subr.mxu0 0.0
    %515 = vmatpush1.msra.mxu0 0.0
    %516 = vmatprep.subr.mxu0 0.0
    %517 = vmatpush1.msra.mxu0 0.0
    %518 = vmatprep.subr.mxu0 0.0
    %519 = vmatpush1.msra.mxu0 0.0
    %520 = vmatprep.subr.mxu0 0.0
    %521 = vmatpush1.msra.mxu0 0.0
    %522 = vmatprep.subr.mxu0 0.0
    %523 = vmatpush1.msra.mxu0 0.0
    %524 = vmatprep.subr.mxu0 0.0
    %525 = vmatpush1.msra.mxu0 0.0
    %526 = vmatprep.subr.mxu0 0.0
    %527 = vmatpush1.msra.mxu0 0.0
    %528 = vmatprep.subr.mxu0 0.0
    %529 = vmatpush1.msra.mxu0 0.0
    %530 = vmatprep.subr.mxu0 0.0
    %531 = vmatpush1.msra.mxu0 0.0
    %532 = vmatprep.subr.mxu0 0.0
    %533 = vmatpush1.msra.mxu0 0.0
    %534 = vmatprep.subr.mxu0 0.0
    %535 = vmatpush1.msra.mxu0 0.0
    %536 = vmatprep.subr.mxu0 0.0
    %537 = vmatpush1.msra.mxu0 0.0
    %538 = vmatprep.subr.mxu0 0.0
    %539 = vmatpush1.msra.mxu0 0.0
    %540 = vmatprep.subr.mxu0 0.0
    %541 = vmatpush1.msra.mxu0 0.0
    %542 = vmatprep.subr.mxu0 0.0
    %543 = vmatpush1.msra.mxu0 0.0
    %544 = vmatprep.subr.mxu0 0.0
    %545 = vmatpush1.msra.mxu0 0.0
    %546 = vmatprep.subr.mxu0 0.0
    %547 = vmatpush1.msra.mxu0 0.0
    %548 = vmatprep.subr.mxu0 0.0
    %549 = vmatpush1.msra.mxu0 0.0
    %550 = vmatprep.subr.mxu0 0.0
    %551 = vmatpush1.msra.mxu0 0.0
    %552 = vmatprep.subr.mxu0 0.0
    %553 = vmatpush1.msra.mxu0 0.0
    %554 = vmatprep.subr.mxu0 0.0
    %555 = vmatpush1.msra.mxu0 0.0
    %556 = vmatprep.subr.mxu0 0.0
    %557 = vmatpush1.msra.mxu0 0.0
    %558 = vmatprep.subr.mxu0 0.0
    %559 = vmatpush1.msra.mxu0 0.0
    %560 = vmatprep.subr.mxu0 0.0
    %561 = vmatpush1.msra.mxu0 0.0
    %562 = vmatprep.mubr.f32.mxu0 0.0
    %563 = vmatmul.mubr.f32.gmra.mrb[0].mxu0 %v493
    %v564 = vpop.f32.mrb[0].mxu0
    %v565 = vadd.f32 0.0, %v564
    %v566 = vpop.f32.mrb[0].mxu0
    %567 = vmatprep.mubr.f32.mxu0 0.0
    %568 = vmatmul.mubr.f32.gmra.mrb[0].mxu0 %v496
    %v569 = vpop.f32.mrb[0].mxu0
    %v570 = vadd.f32 0.0, %v569
    %v571 = vpop.f32.mrb[0].mxu0
    %572 = vdwg.mxu0
    %575 = vrot.lane.b32.xlu0 %v565, 16
    %v576 = vpop.permute.xlu0 %575
    %577 = vrot.lane.b32.xlu0 %v570, 16
    %v578 = vpop.permute.xlu0 %577
    %v581 = vsel %vm134, %v337, %v576
    %v582 = vsel %vm134, %v342, %v578
    %v583 = vld [vmem:[%s6] sm:$0x1]
    %v585 = vlaneseq
    %v586 = vshrl.u32 %v585, 7
    %v587 = vsub.s32 0, %v586
    %v588 = vrot.slane %v583, %v587
    %v590 = vadd.f32 %v581, %v588
    %v591 = vadd.f32 %v582, %v588
    %vm592 = vcmp.gt.f32.partialorder %v590, 0.0
    %vm593 = vcmp.gt.f32.partialorder %v591, 0.0
    %v594 = vmul.f32 %v590, 1.442695
    %v595 = vpow.pop %v594
    %v596 = vmul.f32 %v591, 1.442695
    %v597 = vpow.pop %v596
    %v598 = vsub.f32 %v595, 1.0
    %v599 = vsub.f32 %v597, 1.0
    %v600 = vsel %vm592, %v590, %v598
    %v601 = vsel %vm593, %v591, %v599
    %v602 = vld [vmem:[%s7] sm:$0xff]
    %v603 = vld [vmem:[%s7 + $0x8] sm:$0xff]
    %v604 = vld [vmem:[%s7 + $0x10] sm:$0xff]
    %v605 = vld [vmem:[%s7 + $0x18] sm:$0xff]
    %vm606 = vcmask 261120
    %v608 = vsel %vm606, %v600, 0
    %v611 = vsel %vm606, %v601, 0
    %613 = vmatprep.subr.mxu0 0.0
    %614 = vmatpush1.msra.mxu0 %v602
    %615 = vmatprep.subr.mxu0 0.0
    %616 = vmatpush1.msra.mxu0 %v603
    %617 = vmatprep.subr.mxu0 0.0
    %618 = vmatpush1.msra.mxu0 %v604
    %619 = vmatprep.subr.mxu0 0.0
    %620 = vmatpush1.msra.mxu0 %v605
    %621 = vmatprep.subr.mxu0 0.0
    %622 = vmatpush1.msra.mxu0 0.0
    %623 = vmatprep.subr.mxu0 0.0
    %624 = vmatpush1.msra.mxu0 0.0
    %625 = vmatprep.subr.mxu0 0.0
    %626 = vmatpush1.msra.mxu0 0.0
    %627 = vmatprep.subr.mxu0 0.0
    %628 = vmatpush1.msra.mxu0 0.0
    %629 = vmatprep.subr.mxu0 0.0
    %630 = vmatpush1.msra.mxu0 0.0
    %631 = vmatprep.subr.mxu0 0.0
    %632 = vmatpush1.msra.mxu0 0.0
    %633 = vmatprep.subr.mxu0 0.0
    %634 = vmatpush1.msra.mxu0 0.0
    %635 = vmatprep.subr.mxu0 0.0
    %636 = vmatpush1.msra.mxu0 0.0
    %637 = vmatprep.subr.mxu0 0.0
    %638 = vmatpush1.msra.mxu0 0.0
    %639 = vmatprep.subr.mxu0 0.0
    %640 = vmatpush1.msra.mxu0 0.0
    %641 = vmatprep.subr.mxu0 0.0
    %642 = vmatpush1.msra.mxu0 0.0
    %643 = vmatprep.subr.mxu0 0.0
    %644 = vmatpush1.msra.mxu0 0.0
    %645 = vmatprep.subr.mxu0 0.0
    %646 = vmatpush1.msra.mxu0 0.0
    %647 = vmatprep.subr.mxu0 0.0
    %648 = vmatpush1.msra.mxu0 0.0
    %649 = vmatprep.subr.mxu0 0.0
    %650 = vmatpush1.msra.mxu0 0.0
    %651 = vmatprep.subr.mxu0 0.0
    %652 = vmatpush1.msra.mxu0 0.0
    %653 = vmatprep.subr.mxu0 0.0
    %654 = vmatpush1.msra.mxu0 0.0
    %655 = vmatprep.subr.mxu0 0.0
    %656 = vmatpush1.msra.mxu0 0.0
    %657 = vmatprep.subr.mxu0 0.0
    %658 = vmatpush1.msra.mxu0 0.0
    %659 = vmatprep.subr.mxu0 0.0
    %660 = vmatpush1.msra.mxu0 0.0
    %661 = vmatprep.subr.mxu0 0.0
    %662 = vmatpush1.msra.mxu0 0.0
    %663 = vmatprep.subr.mxu0 0.0
    %664 = vmatpush1.msra.mxu0 0.0
    %665 = vmatprep.subr.mxu0 0.0
    %666 = vmatpush1.msra.mxu0 0.0
    %667 = vmatprep.subr.mxu0 0.0
    %668 = vmatpush1.msra.mxu0 0.0
    %669 = vmatprep.subr.mxu0 0.0
    %670 = vmatpush1.msra.mxu0 0.0
    %671 = vmatprep.subr.mxu0 0.0
    %672 = vmatpush1.msra.mxu0 0.0
    %673 = vmatprep.subr.mxu0 0.0
    %674 = vmatpush1.msra.mxu0 0.0
    %675 = vmatprep.subr.mxu0 0.0
    %676 = vmatpush1.msra.mxu0 0.0
    %677 = vmatprep.mubr.f32.mxu0 0.0
    %678 = vmatmul.mubr.f32.gmra.mrb[0].mxu0 %v608
    %v679 = vpop.f32.mrb[0].mxu0
    %v680 = vadd.f32 0.0, %v679
    %v681 = vpop.f32.mrb[0].mxu0
    %682 = vmatprep.mubr.f32.mxu0 0.0
    %683 = vmatmul.mubr.f32.gmra.mrb[0].mxu0 %v611
    %v684 = vpop.f32.mrb[0].mxu0
    %v685 = vadd.f32 0.0, %v684
    %v686 = vpop.f32.mrb[0].mxu0
    %687 = vdwg.mxu0
    %v688 = vld [vmem:[%s8] sm:$0x1]
    %v689 = vld [vmem:[%s9] sm:$0x1]
    %v691 = vsel %vm50, %v688, 0
    %v694 = vsel %vm50, %v680, 0
    %v697 = vsel %vm50, %v685, 0
    %699 = vmatprep.subr.mxu0 0.0
    %700 = vmatpush1.xpose.msra.mxu0 %v694
    %701 = vmatprep.subr.mxu0 0.0
    %702 = vmatpush1.xpose.msra.mxu0 %v697
    %703 = vmatprep.subr.mxu0 0.0
    %704 = vmatpush1.xpose.msra.mxu0 0.0
    %705 = vmatprep.subr.mxu0 0.0
    %706 = vmatpush1.xpose.msra.mxu0 0.0
    %707 = vmatprep.subr.mxu0 0.0
    %708 = vmatpush1.xpose.msra.mxu0 0.0
    %709 = vmatprep.subr.mxu0 0.0
    %710 = vmatpush1.xpose.msra.mxu0 0.0
    %711 = vmatprep.subr.mxu0 0.0
    %712 = vmatpush1.xpose.msra.mxu0 0.0
    %713 = vmatprep.subr.mxu0 0.0
    %714 = vmatpush1.xpose.msra.mxu0 0.0
    %715 = vmatprep.subr.mxu0 0.0
    %716 = vmatpush1.xpose.msra.mxu0 0.0
    %717 = vmatprep.subr.mxu0 0.0
    %718 = vmatpush1.xpose.msra.mxu0 0.0
    %719 = vmatprep.subr.mxu0 0.0
    %720 = vmatpush1.xpose.msra.mxu0 0.0
    %721 = vmatprep.subr.mxu0 0.0
    %722 = vmatpush1.xpose.msra.mxu0 0.0
    %723 = vmatprep.subr.mxu0 0.0
    %724 = vmatpush1.xpose.msra.mxu0 0.0
    %725 = vmatprep.subr.mxu0 0.0
    %726 = vmatpush1.xpose.msra.mxu0 0.0
    %727 = vmatprep.subr.mxu0 0.0
    %728 = vmatpush1.xpose.msra.mxu0 0.0
    %729 = vmatprep.subr.mxu0 0.0
    %730 = vmatpush1.xpose.msra.mxu0 0.0
    %731 = vmatprep.subr.mxu0 0.0
    %732 = vmatpush1.xpose.msra.mxu0 0.0
    %733 = vmatprep.subr.mxu0 0.0
    %734 = vmatpush1.xpose.msra.mxu0 0.0
    %735 = vmatprep.subr.mxu0 0.0
    %736 = vmatpush1.xpose.msra.mxu0 0.0
    %737 = vmatprep.subr.mxu0 0.0
    %738 = vmatpush1.xpose.msra.mxu0 0.0
    %739 = vmatprep.subr.mxu0 0.0
    %740 = vmatpush1.xpose.msra.mxu0 0.0
    %741 = vmatprep.subr.mxu0 0.0
    %742 = vmatpush1.xpose.msra.mxu0 0.0
    %743 = vmatprep.subr.mxu0 0.0
    %744 = vmatpush1.xpose.msra.mxu0 0.0
    %745 = vmatprep.subr.mxu0 0.0
    %746 = vmatpush1.xpose.msra.mxu0 0.0
    %747 = vmatprep.subr.mxu0 0.0
    %748 = vmatpush1.xpose.msra.mxu0 0.0
    %749 = vmatprep.subr.mxu0 0.0
    %750 = vmatpush1.xpose.msra.mxu0 0.0
    %751 = vmatprep.subr.mxu0 0.0
    %752 = vmatpush1.xpose.msra.mxu0 0.0
    %753 = vmatprep.subr.mxu0 0.0
    %754 = vmatpush1.xpose.msra.mxu0 0.0
    %755 = vmatprep.subr.mxu0 0.0
    %756 = vmatpush1.xpose.msra.mxu0 0.0
    %757 = vmatprep.subr.mxu0 0.0
    %758 = vmatpush1.xpose.msra.mxu0 0.0
    %759 = vmatprep.subr.mxu0 0.0
    %760 = vmatpush1.xpose.msra.mxu0 0.0
    %761 = vmatprep.subr.mxu0 0.0
    %762 = vmatpush1.xpose.msra.mxu0 0.0
    %763 = vmatprep.mubr.f32.mxu0 0.0
    %764 = vmatmul.mubr.f32.gmra.mrb[0].mxu0 %v691
    %v765 = vpop.f32.mrb[0].mxu0
    %v766 = vadd.f32 0.0, %v765
    %v767 = vpop.f32.mrb[0].mxu0
    %768 = vdwg.mxu0
    %v770 = vlaneseq
    %v771 = vshrl.u32 %v770, 7
    %v772 = vsub.s32 0, %v771
    %v773 = vrot.slane %v689, %v772
    %v775 = vmul.f32 %v680, %v773
    %v776 = vmul.f32 %v685, %v773
    %v777 = vsel %vm50, %v775, 0.0
    %778 = vadd.xlane.f32.xlu0 %v777
    %v779 = vpop.xlane.xlu0 %778
    %v780 = vsel %vm50, %v776, 0.0
    %781 = vadd.xlane.f32.xlu0 %v780
    %v782 = vpop.xlane.xlu0 %781
    %v783 = vlaneseq
    %v784 = vshrl.u32 %v783, 7
    %v785 = vsub.s32 0, %v784
    %v786 = vrot.slane %v766, %v785
    %v787 = vadd.f32 %v779, %v786
    %v788 = vadd.f32 %v782, %v786
    %vm789 = vcmp.gt.f32.partialorder %v787, 0.0
    %vm790 = vcmp.gt.f32.partialorder %v788, 0.0
    %v791 = vmul.f32 %v787, 0.2
    %v792 = vmul.f32 %v788, 0.2
    %v793 = vsel %vm789, %v787, %v791
    %v794 = vsel %vm790, %v788, %v792
    %v795 = vadd.f32 %v793, %v47
    %v796 = vadd.f32 %v794, %v48
    %v797 = vsel %vm134, %v795, -inf
    %798 = vmax.xlane.f32.xlu0 %v797
    %v799 = vpop.xlane.xlu0 %798
    %v800 = vsel %vm134, %v796, -inf
    %801 = vmax.xlane.f32.xlu0 %v800
    %v802 = vpop.xlane.xlu0 %801
    %v803 = vsub.f32 %v795, %v799
    %v804 = vsub.f32 %v796, %v802
    %v805 = vmul.f32 %v803, 1.442695
    %v806 = vpow.pop %v805
    %v807 = vmul.f32 %v804, 1.442695
    %v808 = vpow.pop %v807
    %v809 = vsel %vm134, %v806, 0.0
    %810 = vadd.xlane.f32.xlu0 %v809
    %v811 = vpop.xlane.xlu0 %810
    %v812 = vsel %vm134, %v808, 0.0
    %813 = vadd.xlane.f32.xlu0 %v812
    %v814 = vpop.xlane.xlu0 %813
    %v815 = vmax.f32 %v811, 1e-30
    %v816 = vmax.f32 %v814, 1e-30
    %v817 = vrcp.pop %v815
    %v818 = vrcp.pop %v816
    %v819 = vmul.f32 %v806, %v817
    %v820 = vmul.f32 %v808, %v818
    %v821 = vld [vmem:[%s10] sm:$0x1]
    %v823 = vlaneseq
    %v824 = vshrl.u32 %v823, 7
    %v825 = vsub.s32 0, %v824
    %v826 = vrot.slane %v821, %v825
    %v829 = vsel %vm134, %v819, 0
    %v832 = vsel %vm134, %v820, 0
    %834 = vmatprep.subr.mxu0 0.0
    %835 = vmatpush1.msra.mxu0 %v680
    %836 = vmatprep.subr.mxu0 0.0
    %837 = vmatpush1.msra.mxu0 %v685
    %838 = vmatprep.subr.mxu0 0.0
    %839 = vmatpush1.msra.mxu0 0.0
    %840 = vmatprep.subr.mxu0 0.0
    %841 = vmatpush1.msra.mxu0 0.0
    %842 = vmatprep.subr.mxu0 0.0
    %843 = vmatpush1.msra.mxu0 0.0
    %844 = vmatprep.subr.mxu0 0.0
    %845 = vmatpush1.msra.mxu0 0.0
    %846 = vmatprep.subr.mxu0 0.0
    %847 = vmatpush1.msra.mxu0 0.0
    %848 = vmatprep.subr.mxu0 0.0
    %849 = vmatpush1.msra.mxu0 0.0
    %850 = vmatprep.subr.mxu0 0.0
    %851 = vmatpush1.msra.mxu0 0.0
    %852 = vmatprep.subr.mxu0 0.0
    %853 = vmatpush1.msra.mxu0 0.0
    %854 = vmatprep.subr.mxu0 0.0
    %855 = vmatpush1.msra.mxu0 0.0
    %856 = vmatprep.subr.mxu0 0.0
    %857 = vmatpush1.msra.mxu0 0.0
    %858 = vmatprep.subr.mxu0 0.0
    %859 = vmatpush1.msra.mxu0 0.0
    %860 = vmatprep.subr.mxu0 0.0
    %861 = vmatpush1.msra.mxu0 0.0
    %862 = vmatprep.subr.mxu0 0.0
    %863 = vmatpush1.msra.mxu0 0.0
    %864 = vmatprep.subr.mxu0 0.0
    %865 = vmatpush1.msra.mxu0 0.0
    %866 = vmatprep.subr.mxu0 0.0
    %867 = vmatpush1.msra.mxu0 0.0
    %868 = vmatprep.subr.mxu0 0.0
    %869 = vmatpush1.msra.mxu0 0.0
    %870 = vmatprep.subr.mxu0 0.0
    %871 = vmatpush1.msra.mxu0 0.0
    %872 = vmatprep.subr.mxu0 0.0
    %873 = vmatpush1.msra.mxu0 0.0
    %874 = vmatprep.subr.mxu0 0.0
    %875 = vmatpush1.msra.mxu0 0.0
    %876 = vmatprep.subr.mxu0 0.0
    %877 = vmatpush1.msra.mxu0 0.0
    %878 = vmatprep.subr.mxu0 0.0
    %879 = vmatpush1.msra.mxu0 0.0
    %880 = vmatprep.subr.mxu0 0.0
    %881 = vmatpush1.msra.mxu0 0.0
    %882 = vmatprep.subr.mxu0 0.0
    %883 = vmatpush1.msra.mxu0 0.0
    %884 = vmatprep.subr.mxu0 0.0
    %885 = vmatpush1.msra.mxu0 0.0
    %886 = vmatprep.subr.mxu0 0.0
    %887 = vmatpush1.msra.mxu0 0.0
    %888 = vmatprep.subr.mxu0 0.0
    %889 = vmatpush1.msra.mxu0 0.0
    %890 = vmatprep.subr.mxu0 0.0
    %891 = vmatpush1.msra.mxu0 0.0
    %892 = vmatprep.subr.mxu0 0.0
    %893 = vmatpush1.msra.mxu0 0.0
    %894 = vmatprep.subr.mxu0 0.0
    %895 = vmatpush1.msra.mxu0 0.0
    %896 = vmatprep.subr.mxu0 0.0
    %897 = vmatpush1.msra.mxu0 0.0
    %898 = vmatprep.mubr.f32.mxu0 0.0
    %899 = vmatmul.mubr.f32.gmra.mrb[0].mxu0 %v829
    %v900 = vpop.f32.mrb[0].mxu0
    %v901 = vadd.f32 %v826, %v900
    %v902 = vpop.f32.mrb[0].mxu0
    %903 = vmatprep.mubr.f32.mxu0 0.0
    %904 = vmatmul.mubr.f32.gmra.mrb[0].mxu0 %v832
    %v905 = vpop.f32.mrb[0].mxu0
    %v906 = vadd.f32 %v826, %v905
    %v907 = vpop.f32.mrb[0].mxu0
    %908 = vdwg.mxu0
    %vm909 = vcmp.gt.f32.partialorder %v901, 0.0
    %vm910 = vcmp.gt.f32.partialorder %v906, 0.0
    %v911 = vmul.f32 %v901, 1.442695
    %v912 = vpow.pop %v911
    %v913 = vmul.f32 %v906, 1.442695
    %v914 = vpow.pop %v913
    %v915 = vsub.f32 %v912, 1.0
    %v916 = vsub.f32 %v914, 1.0
    %v917 = vsel %vm909, %v901, %v915
    %v918 = vsel %vm910, %v906, %v916
    %v919 = vld [vmem:[%s2] sm:$0x3]
    %v921 = vsel %vm134, %v919, 0
    %923 = vmatprep.subr.mxu0 0.0
    %924 = vmatpush1.msra.mxu0 %v917
    %925 = vmatprep.subr.mxu0 0.0
    %926 = vmatpush1.msra.mxu0 %v918
    %927 = vmatprep.subr.mxu0 0.0
    %928 = vmatpush1.msra.mxu0 0.0
    %929 = vmatprep.subr.mxu0 0.0
    %930 = vmatpush1.msra.mxu0 0.0
    %931 = vmatprep.subr.mxu0 0.0
    %932 = vmatpush1.msra.mxu0 0.0
    %933 = vmatprep.subr.mxu0 0.0
    %934 = vmatpush1.msra.mxu0 0.0
    %935 = vmatprep.subr.mxu0 0.0
    %936 = vmatpush1.msra.mxu0 0.0
    %937 = vmatprep.subr.mxu0 0.0
    %938 = vmatpush1.msra.mxu0 0.0
    %939 = vmatprep.subr.mxu0 0.0
    %940 = vmatpush1.msra.mxu0 0.0
    %941 = vmatprep.subr.mxu0 0.0
    %942 = vmatpush1.msra.mxu0 0.0
    %943 = vmatprep.subr.mxu0 0.0
    %944 = vmatpush1.msra.mxu0 0.0
    %945 = vmatprep.subr.mxu0 0.0
    %946 = vmatpush1.msra.mxu0 0.0
    %947 = vmatprep.subr.mxu0 0.0
    %948 = vmatpush1.msra.mxu0 0.0
    %949 = vmatprep.subr.mxu0 0.0
    %950 = vmatpush1.msra.mxu0 0.0
    %951 = vmatprep.subr.mxu0 0.0
    %952 = vmatpush1.msra.mxu0 0.0
    %953 = vmatprep.subr.mxu0 0.0
    %954 = vmatpush1.msra.mxu0 0.0
    %955 = vmatprep.subr.mxu0 0.0
    %956 = vmatpush1.msra.mxu0 0.0
    %957 = vmatprep.subr.mxu0 0.0
    %958 = vmatpush1.msra.mxu0 0.0
    %959 = vmatprep.subr.mxu0 0.0
    %960 = vmatpush1.msra.mxu0 0.0
    %961 = vmatprep.subr.mxu0 0.0
    %962 = vmatpush1.msra.mxu0 0.0
    %963 = vmatprep.subr.mxu0 0.0
    %964 = vmatpush1.msra.mxu0 0.0
    %965 = vmatprep.subr.mxu0 0.0
    %966 = vmatpush1.msra.mxu0 0.0
    %967 = vmatprep.subr.mxu0 0.0
    %968 = vmatpush1.msra.mxu0 0.0
    %969 = vmatprep.subr.mxu0 0.0
    %970 = vmatpush1.msra.mxu0 0.0
    %971 = vmatprep.subr.mxu0 0.0
    %972 = vmatpush1.msra.mxu0 0.0
    %973 = vmatprep.subr.mxu0 0.0
    %974 = vmatpush1.msra.mxu0 0.0
    %975 = vmatprep.subr.mxu0 0.0
    %976 = vmatpush1.msra.mxu0 0.0
    %977 = vmatprep.subr.mxu0 0.0
    %978 = vmatpush1.msra.mxu0 0.0
    %979 = vmatprep.subr.mxu0 0.0
    %980 = vmatpush1.msra.mxu0 0.0
    %981 = vmatprep.subr.mxu0 0.0
    %982 = vmatpush1.msra.mxu0 0.0
    %983 = vmatprep.subr.mxu0 0.0
    %984 = vmatpush1.msra.mxu0 0.0
    %985 = vmatprep.subr.mxu0 0.0
    %986 = vmatpush1.msra.mxu0 0.0
    %987 = vmatprep.mubr.f32.mxu0 0.0
    %988 = vmatmul.mubr.f32.gmra.mrb[0].mxu0 %v921
    %v989 = vpop.f32.mrb[0].mxu0
    %v990 = vadd.f32 0.0, %v989
    %v991 = vpop.f32.mrb[0].mxu0
    %992 = vdwg.mxu0
    %v993 = vld [vmem:[%s11] sm:$0xff]
    %v994 = vld [vmem:[%s12] sm:$0x1]
    %v996 = vlaneseq
    %v997 = vshrl.u32 %v996, 7
    %v998 = vsub.s32 0, %v997
    %v999 = vrot.slane %v994, %v998
    %v1002 = vsel %vm50, %v990, 0
    %1004 = vmatprep.subr.mxu0 0.0
    %1005 = vmatpush1.msra.mxu0 %v993
    %1006 = vmatprep.subr.mxu0 0.0
    %1007 = vmatpush1.msra.mxu0 0.0
    %1008 = vmatprep.subr.mxu0 0.0
    %1009 = vmatpush1.msra.mxu0 0.0
    %1010 = vmatprep.subr.mxu0 0.0
    %1011 = vmatpush1.msra.mxu0 0.0
    %1012 = vmatprep.subr.mxu0 0.0
    %1013 = vmatpush1.msra.mxu0 0.0
    %1014 = vmatprep.subr.mxu0 0.0
    %1015 = vmatpush1.msra.mxu0 0.0
    %1016 = vmatprep.subr.mxu0 0.0
    %1017 = vmatpush1.msra.mxu0 0.0
    %1018 = vmatprep.subr.mxu0 0.0
    %1019 = vmatpush1.msra.mxu0 0.0
    %1020 = vmatprep.subr.mxu0 0.0
    %1021 = vmatpush1.msra.mxu0 0.0
    %1022 = vmatprep.subr.mxu0 0.0
    %1023 = vmatpush1.msra.mxu0 0.0
    %1024 = vmatprep.subr.mxu0 0.0
    %1025 = vmatpush1.msra.mxu0 0.0
    %1026 = vmatprep.subr.mxu0 0.0
    %1027 = vmatpush1.msra.mxu0 0.0
    %1028 = vmatprep.subr.mxu0 0.0
    %1029 = vmatpush1.msra.mxu0 0.0
    %1030 = vmatprep.subr.mxu0 0.0
    %1031 = vmatpush1.msra.mxu0 0.0
    %1032 = vmatprep.subr.mxu0 0.0
    %1033 = vmatpush1.msra.mxu0 0.0
    %1034 = vmatprep.subr.mxu0 0.0
    %1035 = vmatpush1.msra.mxu0 0.0
    %1036 = vmatprep.subr.mxu0 0.0
    %1037 = vmatpush1.msra.mxu0 0.0
    %1038 = vmatprep.subr.mxu0 0.0
    %1039 = vmatpush1.msra.mxu0 0.0
    %1040 = vmatprep.subr.mxu0 0.0
    %1041 = vmatpush1.msra.mxu0 0.0
    %1042 = vmatprep.subr.mxu0 0.0
    %1043 = vmatpush1.msra.mxu0 0.0
    %1044 = vmatprep.subr.mxu0 0.0
    %1045 = vmatpush1.msra.mxu0 0.0
    %1046 = vmatprep.subr.mxu0 0.0
    %1047 = vmatpush1.msra.mxu0 0.0
    %1048 = vmatprep.subr.mxu0 0.0
    %1049 = vmatpush1.msra.mxu0 0.0
    %1050 = vmatprep.subr.mxu0 0.0
    %1051 = vmatpush1.msra.mxu0 0.0
    %1052 = vmatprep.subr.mxu0 0.0
    %1053 = vmatpush1.msra.mxu0 0.0
    %1054 = vmatprep.subr.mxu0 0.0
    %1055 = vmatpush1.msra.mxu0 0.0
    %1056 = vmatprep.subr.mxu0 0.0
    %1057 = vmatpush1.msra.mxu0 0.0
    %1058 = vmatprep.subr.mxu0 0.0
    %1059 = vmatpush1.msra.mxu0 0.0
    %1060 = vmatprep.subr.mxu0 0.0
    %1061 = vmatpush1.msra.mxu0 0.0
    %1062 = vmatprep.subr.mxu0 0.0
    %1063 = vmatpush1.msra.mxu0 0.0
    %1064 = vmatprep.subr.mxu0 0.0
    %1065 = vmatpush1.msra.mxu0 0.0
    %1066 = vmatprep.subr.mxu0 0.0
    %1067 = vmatpush1.msra.mxu0 0.0
    %1068 = vmatprep.mubr.f32.mxu0 0.0
    %1069 = vmatmul.mubr.f32.gmra.mrb[0].mxu0 %v1002
    %v1070 = vpop.f32.mrb[0].mxu0
    %v1071 = vadd.f32 %v999, %v1070
    %v1072 = vpop.f32.mrb[0].mxu0
    %1073 = vdwg.mxu0
    %vm1074 = vcmask 25600
    %1075 = vst.msk [vmem:[#allocation2] sm:$0x3] %vm1074, %v1071
    // Predicated region
    $region54: #{tpu_custom_call.1} parent=1 // pred_check
      _
    $region55: #{tpu_custom_call.1} parent=1 // pred_check_branch
      %1077 = sbr.rel (0) target = $region57
    $region56: #{tpu_custom_call.1} parent=1 // pred_region
      %s1079 = ssub.s32 32, 32
      %1080 = vsyncadd [#allocation3], %s1079
      %s1082 = sshll.u32 [#allocation2], 4
      %s1083 = int_to_ptr.vmem [resolvable:$true] %s1082
      %1085 = dma.vmem_to_hbm [thread:$0]  %s1083, 32, %s13, [#allocation3]
    $region57: #{tpu_custom_call.1} parent=1 // pred_fallthru
      _
    // Predicated region
    $region58: #{tpu_custom_call.1} parent=1 // pred_check
      _
    $region59: #{tpu_custom_call.1} parent=1 // pred_check_branch
      %1087 = sbr.rel (0) target = $region61
    $region60: #{tpu_custom_call.1} parent=1 // pred_region
      %1088 = dma.done [#allocation3], 32
    $region61: #{tpu_custom_call.1} parent=1 // pred_fallthru
      _
    %1089 = vsyncpa [#allocation3], 1

</llo_original>
